<compile_context>
chip_gen: v5e
topology: v5e:2x2
jax: 0.10.0
libtpu: 0.0.40
codegen_flags: <defaults>
</compile_context>

<pallas_src>
import functools

import jax
import jax.numpy as jnp
from jax.experimental import pallas as pl
from jax.experimental.pallas import tpu as pltpu

_MIB = 1 << 20


# --------------------------------------------------------------------------
# Hardware queries (safe fallbacks; perf-only decisions, never correctness).
# --------------------------------------------------------------------------
def _tpu_info():
    try:
        return pltpu.get_tpu_info()
    except Exception:
        return None


def _vmem_capacity_bytes():
    info = _tpu_info()
    if info is not None:
        try:
            return int(info.vmem_capacity_bytes)
        except Exception:
            pass
    return 64 * _MIB  # conservative default (v7x per-core figure)


def _num_tensorcores():
    try:
        nc = getattr(jax.devices()[0], "num_cores", None)
        if nc:
            return int(nc)
    except Exception:
        pass
    info = _tpu_info()
    if info is not None:
        try:
            # 64 MiB-per-core VMEM parts (v7x) have 2 TensorCores per chip.
            return 2 if int(info.vmem_capacity_bytes) <= 80 * _MIB else 1
        except Exception:
            pass
    return 1


# --------------------------------------------------------------------------
# Fused single-pass kernel: one batch element's whole (C, HW) slab per step.
# --------------------------------------------------------------------------
def _fused_kernel(x_ref, w_ref, b_ref, o_ref):
    # x_ref: (1, C, HW) native dtype; w_ref: (C, C) f32; b_ref: (C, 1) f32
    x = x_ref[0]                                                    # (C, HW)
    # AdaptiveAvgPool2d(1): f32 accumulation inside the reduce itself; no
    # explicit full-slab .astype(f32) copy.
    mean = jnp.sum(x, axis=-1, keepdims=True,
                   dtype=jnp.float32) * (1.0 / x.shape[-1])         # (C, 1)
    # 1x1 conv on the pooled vector == tiny (C,C)@(C,1) + bias (MXU otherwise
    # idle, off the memory-bound critical path).
    attn = jnp.dot(w_ref[...], mean,
                   preferred_element_type=jnp.float32) + b_ref[...]  # (C, 1)
    # Scale in the native dtype: no full-block f32 copy for the multiply.
    o_ref[0] = x * attn.astype(x.dtype)


# --------------------------------------------------------------------------
# Two-pass path kernels.
# --------------------------------------------------------------------------
def _pool_attn_kernel(x_ref, w_ref, b_ref, attn_ref, *, hw, tile, n_t):
    # x_ref: (1, C, tile) native; w_ref: (C, C) f32; b_ref: (C, 1) f32
    # attn_ref: (1, C, 1) f32 -- running channel-sum accumulator, overwritten
    # with the attention vector (conv+bias epilogue) on the last tile.
    k = pl.program_id(1)

    @pl.when(k == 0)
    def _():
        attn_ref[...] = jnp.zeros_like(attn_ref)

    if hw % tile == 0:
        # No partial tile anywhere: unmasked fast path on every step.
        attn_ref[0] += jnp.sum(x_ref[0], axis=-1, keepdims=True,
                               dtype=jnp.float32)
    else:
        # Mask only the final partial tile; all other tiles take the fast path.
        @pl.when(k < n_t - 1)
        def _():
            attn_ref[0] += jnp.sum(x_ref[0], axis=-1, keepdims=True,
                                   dtype=jnp.float32)

        @pl.when(k == n_t - 1)
        def _():
            x = x_ref[0].astype(jnp.float32)
            lane = jax.lax.broadcasted_iota(jnp.int32, x.shape, 1)
            x = jnp.where(k * tile + lane < hw, x, 0.0)
            attn_ref[0] += jnp.sum(x, axis=-1, keepdims=True)

    # Epilogue: fold the tiny 1x1 conv into pass 1 so it directly emits attn.
    @pl.when(k == n_t - 1)
    def _():
        mean = attn_ref[0] * (1.0 / hw)                             # (C, 1)
        attn_ref[0] = jnp.dot(w_ref[...], mean,
                              preferred_element_type=jnp.float32) + b_ref[...]


def _scale_kernel(x_ref, attn_ref, o_ref):
    # x_ref/o_ref: (1, C, tile) native dtype; attn_ref: (1, C, 1) f32
    o_ref[0] = x_ref[0] * attn_ref[0].astype(o_ref.dtype)


# --------------------------------------------------------------------------
# Wrapper
# --------------------------------------------------------------------------
def channel_attention(x_nchw, weight, bias, *, force_two_pass=False,
                      hw_tile=None):
    """x_nchw: (N, C, H, W); weight: (C_out, C_in, 1, 1); bias: (C_out,)."""
    N, C, H, W = x_nchw.shape
    HW = H * W
    dtype = x_nchw.dtype
    isz = jnp.dtype(dtype).itemsize

    # Free reshape: NCHW -> (N, C, HW). No transposes anywhere.
    x = x_nchw.reshape(N, C, HW)
    w = weight[:, :, 0, 0].astype(jnp.float32)                      # (C_out, C_in)
    b_col = bias.astype(jnp.float32).reshape(C, 1)

    vmem_cap = _vmem_capacity_bytes()

    # Fused-path VMEM need: double-buffered input + output slabs, params, plus
    # an allowance for the f32 reduce temporary when the input is sub-32-bit.
    slab = C * HW * isz
    reduce_tmp = C * HW * 4 if isz < 4 else 0
    fused_need = 2 * (2 * slab) + reduce_tmp + 2 * (C * C * 4 + C * 4)

    # Generation-aware cutoff: ~80% of physical VMEM (~51 MiB v7x, ~102 MiB
    # v5e/v6e).  For N==1 on a dual-core part, prefer the 2-pass path so both
    # TensorCores are engaged.
    fused_budget = int(0.80 * vmem_cap)
    prefer_two_pass = force_two_pass or (N == 1 and _num_tensorcores() >= 2)
    use_fused = (not prefer_two_pass) and fused_need <= fused_budget

    if use_fused:
        # Leave >=12 MiB headroom below physical VMEM for Mosaic scratch.
        vmem_limit = int(min(fused_need + 4 * _MIB, vmem_cap - 12 * _MIB))
        vmem_limit = max(vmem_limit, 16 * _MIB)
        out = pl.pallas_call(
            _fused_kernel,
            out_shape=jax.ShapeDtypeStruct((N, C, HW), dtype),
            grid_spec=pltpu.PrefetchScalarGridSpec(
                num_scalar_prefetch=0,
                grid=(N,),
                in_specs=[
                    pl.BlockSpec((1, C, HW), lambda n: (n, 0, 0)),
                    pl.BlockSpec((C, C), lambda n: (0, 0)),
                    pl.BlockSpec((C, 1), lambda n: (0, 0)),
                ],
                out_specs=pl.BlockSpec((1, C, HW), lambda n: (n, 0, 0)),
            ),
            compiler_params=pltpu.CompilerParams(
                dimension_semantics=("parallel",),
                vmem_limit_bytes=vmem_limit,
            ),
        )(x, w, b_col)
        return out.reshape(N, C, H, W)

    # ---------------- two-pass path (HW tiled) ----------------
    if hw_tile is None:
        # Lane-dense tile: multiple of 128, >= 512 lanes, ~<= 8 MiB per buffer
        # (fewer grid steps; step overhead matters most on v7x's fast HBM).
        per_buf = 8 * _MIB
        cap = max(512, (per_buf // max(1, C * isz)) // 128 * 128)
        tile = HW if HW <= cap else cap
        if HW > cap:
            # Prefer a multiple-of-128 divisor of HW (>= cap/2) so the pool
            # pass needs no lane masking at all.
            for t in range(cap, max(128, cap // 2) - 1, -128):
                if HW % t == 0:
                    tile = t
                    break
    else:
        tile = hw_tile
        assert tile == HW or tile % 128 == 0, \
            "hw_tile must be HW or a multiple of 128"
    n_t = pl.cdiv(HW, tile)

    # Pass 1: pooled channel sums (f32 accumulation), reduction axis last /
    # "arbitrary"; tiny conv+bias folded into the last-tile epilogue so the
    # kernel directly emits the (N, C, 1) attention vector.
    attn = pl.pallas_call(
        functools.partial(_pool_attn_kernel, hw=HW, tile=tile, n_t=n_t),
        out_shape=jax.ShapeDtypeStruct((N, C, 1), jnp.float32),
        grid_spec=pltpu.PrefetchScalarGridSpec(
            num_scalar_prefetch=0,
            grid=(N, n_t),
            in_specs=[
                pl.BlockSpec((1, C, tile), lambda n, k: (n, 0, k)),
                pl.BlockSpec((C, C), lambda n, k: (0, 0)),
                pl.BlockSpec((C, 1), lambda n, k: (0, 0)),
            ],
            out_specs=pl.BlockSpec((1, C, 1), lambda n, k: (n, 0, 0)),
        ),
        compiler_params=pltpu.CompilerParams(
            dimension_semantics=("parallel", "arbitrary"),
            vmem_limit_bytes=int(min(32 * _MIB, vmem_cap - 12 * _MIB)),
        ),
    )(x, w, b_col)

    # Pass 2: streaming elementwise scale, lane-dense tiles, fully parallel grid.
    out = pl.pallas_call(
        _scale_kernel,
        out_shape=jax.ShapeDtypeStruct((N, C, HW), dtype),
        grid_spec=pltpu.PrefetchScalarGridSpec(
            num_scalar_prefetch=0,
            grid=(N, n_t),
            in_specs=[
                pl.BlockSpec((1, C, tile), lambda n, k: (n, 0, k)),
                pl.BlockSpec((1, C, 1), lambda n, k: (n, 0, 0)),
            ],
            out_specs=pl.BlockSpec((1, C, tile), lambda n, k: (n, 0, k)),
        ),
        compiler_params=pltpu.CompilerParams(
            dimension_semantics=("parallel", "parallel"),
            vmem_limit_bytes=int(min(40 * _MIB, vmem_cap - 12 * _MIB)),
        ),
    )(x, attn)
    return out.reshape(N, C, H, W)


def channel_attention_ref(x_nchw, weight, bias):
    # pure-JAX reference of the PyTorch forward (f32 math)
    xf = x_nchw.astype(jnp.float32)
    pooled = jnp.mean(xf, axis=(2, 3))                              # (N, C)
    attn = pooled @ weight[:, :, 0, 0].astype(jnp.float32).T \
        + bias.astype(jnp.float32)                                  # (N, C)
    return xf * attn[:, :, None, None]


if __name__ == "__main__":
    key = jax.random.PRNGKey(0)
    kx, kw, kb = jax.random.split(key, 3)

    # --- test 1: fused single-pass path (f32) ---
    N, C, H, W = 2, 4, 16, 16
    x = jax.random.normal(kx, (N, C, H, W), dtype=jnp.float32)
    bound = 1.0 / (C ** 0.5)
    weight = jax.random.uniform(kw, (C, C, 1, 1), jnp.float32, -bound, bound)
    bias = jax.random.uniform(kb, (C,), jnp.float32, -bound, bound)

    out = jax.block_until_ready(channel_attention(x, weight, bias))
    ref = channel_attention_ref(x, weight, bias)
    assert out.shape == (N, C, H, W)
    assert jnp.allclose(out, ref, atol=1e-5, rtol=1e-5), "fused path mismatch"

    # --- test 2: two-pass tiled path (HW=400, tile=128 -> masked last tile) ---
    N2, C2, H2, W2 = 2, 8, 20, 20
    x2 = jax.random.normal(kx, (N2, C2, H2, W2), dtype=jnp.float32)
    bound2 = 1.0 / (C2 ** 0.5)
    w2 = jax.random.uniform(kw, (C2, C2, 1, 1), jnp.float32, -bound2, bound2)
    b2 = jax.random.uniform(kb, (C2,), jnp.float32, -bound2, bound2)

    out2 = jax.block_until_ready(
        channel_attention(x2, w2, b2, force_two_pass=True, hw_tile=128))
    ref2 = channel_attention_ref(x2, w2, b2)
    assert out2.shape == (N2, C2, H2, W2)
    assert jnp.allclose(out2, ref2, atol=1e-5, rtol=1e-5), "two-pass mismatch"

    # --- test 3: N=1 default routing (dual-TC parts take the two-pass path) ---
    x3 = jax.random.normal(kx, (1, C2, 16, 16), dtype=jnp.float32)
    out3 = jax.block_until_ready(channel_attention(x3, w2, b2))
    ref3 = channel_attention_ref(x3, w2, b2)
    assert jnp.allclose(out3, ref3, atol=1e-5, rtol=1e-5), "N=1 path mismatch"

    # --- test 4: bf16 fused path (f32 accumulation inside the reduce) ---
    xb = x.astype(jnp.bfloat16)
    outb = jax.block_until_ready(channel_attention(xb, weight, bias))
    refb = channel_attention_ref(xb, weight, bias).astype(jnp.bfloat16)
    assert outb.dtype == jnp.bfloat16
    assert jnp.allclose(outb.astype(jnp.float32), refb.astype(jnp.float32),
                        atol=5e-2, rtol=5e-2), "bf16 fused path mismatch"

    print("KERNEL_OK")
</pallas_src>

<mosaic_0001>
module attributes {stable_mosaic.version = 11 : i64} {
  func.func @_fused_kernel(%arg0: i32, %arg1: memref<1x4x256xf32, #tpu.memory_space<vmem>>, %arg2: memref<4x4xf32, #tpu.memory_space<vmem>>, %arg3: memref<4x1xf32, #tpu.memory_space<vmem>>, %arg4: memref<1x4x256xf32, #tpu.memory_space<vmem>>) attributes {dimension_semantics = [#tpu.dimension_semantics<parallel>], iteration_bounds = array<i64: 2>, scalar_prefetch = 0 : i64, scratch_operands = 0 : i64, tpu.core_type = #tpu.core_type<tc>, window_params = [{transform_indices = @transform_0, window_bounds = array<i64: 1, 4, 256>}, {pipeline_mode = #tpu.pipeline_mode<synchronous>, transform_indices = @transform_1, window_bounds = array<i64: 4, 4>}, {pipeline_mode = #tpu.pipeline_mode<synchronous>, transform_indices = @transform_2, window_bounds = array<i64: 4, 1>}, {transform_indices = @transform_3, window_bounds = array<i64: 1, 4, 256>}]} {
    %c0 = arith.constant 0 : index
    %c0_0 = arith.constant 0 : index
    %c0_1 = arith.constant 0 : index
    %0 = vector.load %arg1[%c0, %c0_0, %c0_1] : memref<1x4x256xf32, #tpu.memory_space<vmem>>, vector<1x4x256xf32>
    %1 = vector.shape_cast %0 : vector<1x4x256xf32> to vector<4x256xf32>
    %cst = arith.constant dense<0.000000e+00> : vector<4xf32>
    %2 = vector.multi_reduction <add>, %1, %cst [1] : vector<4x256xf32> to vector<4xf32>
    %3 = vector.shape_cast %2 : vector<4xf32> to vector<4x1xf32>
    %cst_2 = arith.constant 3.906250e-03 : f32
    %4 = vector.broadcast %cst_2 : f32 to vector<4x1xf32>
    %5 = arith.mulf %3, %4 : vector<4x1xf32>
    %c0_3 = arith.constant 0 : index
    %c0_4 = arith.constant 0 : index
    %6 = vector.load %arg2[%c0_3, %c0_4] : memref<4x4xf32, #tpu.memory_space<vmem>>, vector<4x4xf32>
    %cst_5 = arith.constant dense<0.000000e+00> : vector<4x1xf32>
    %7 = tpu.matmul %6, %5, %cst_5 {dimension_numbers = #tpu.dot_dimension_numbers<[1], [0], [0], [1], [0, 0, 1, 1], [], []>} : vector<4x4xf32>, vector<4x1xf32>, vector<4x1xf32> -> vector<4x1xf32>
    %c0_6 = arith.constant 0 : index
    %c0_7 = arith.constant 0 : index
    %8 = vector.load %arg3[%c0_6, %c0_7] : memref<4x1xf32, #tpu.memory_space<vmem>>, vector<4x1xf32>
    %9 = arith.addf %7, %8 : vector<4x1xf32>
    %10 = vector.broadcast %9 : vector<4x1xf32> to vector<4x256xf32>
    %11 = arith.mulf %1, %10 : vector<4x256xf32>
    %c0_8 = arith.constant 0 : index
    %c0_9 = arith.constant 0 : index
    %c0_10 = arith.constant 0 : index
    %12 = vector.load %arg4[%c0_8, %c0_9, %c0_10] : memref<1x4x256xf32, #tpu.memory_space<vmem>>, vector<1x4x256xf32>
    %13 = vector.shape_cast %12 : vector<1x4x256xf32> to vector<4x256xf32>
    %14 = vector.shape_cast %11 : vector<4x256xf32> to vector<1x4x256xf32>
    tpu.vector_store %arg4[%c0_8, %c0_9, %c0_10], %14 {strides = array<i32>} : memref<1x4x256xf32, #tpu.memory_space<vmem>>, vector<1x4x256xf32>,
    return
  }
  func.func @transform_0(%arg0: i32) -> (i32, i32, i32) {
    %c0_i32 = arith.constant 0 : i32
    %c0_i32_0 = arith.constant 0 : i32
    %c0_i32_1 = arith.constant 0 : i32
    return %arg0, %c0_i32, %c0_i32_0 : i32, i32, i32
  }
  func.func @transform_1(%arg0: i32) -> (i32, i32) {
    %c0_i32 = arith.constant 0 : i32
    %c0_i32_0 = arith.constant 0 : i32
    %c0_i32_1 = arith.constant 0 : i32
    return %c0_i32, %c0_i32_0 : i32, i32
  }
  func.func @transform_2(%arg0: i32) -> (i32, i32) {
    %c0_i32 = arith.constant 0 : i32
    %c0_i32_0 = arith.constant 0 : i32
    %c0_i32_1 = arith.constant 0 : i32
    return %c0_i32, %c0_i32_0 : i32, i32
  }
  func.func @transform_3(%arg0: i32) -> (i32, i32, i32) {
    %c0_i32 = arith.constant 0 : i32
    %c0_i32_0 = arith.constant 0 : i32
    %c0_i32_1 = arith.constant 0 : i32
    return %arg0, %c0_i32, %c0_i32_0 : i32, i32, i32
  }
}

</mosaic_0001>

<llo_original>
// kernel: tpu_custom_call.1
$region0: #{tpu_custom_call.1}
  #allocation0 [shape = 'u32[]', space=smem, size = 0x4, offset = 0x4, fixed_abs, tag = 'smem constant byte address 0x4 - core index']
  #allocation1 [shape = 'u32[72,128]{1,0:T(1,128)}', space=vmem, size = 0x9000, scoped, tag = 'internal scratch']
  %s0 = inlined_call_operand.hbm [shape: f32[2,4,256], index: 0, kind: input, shape index: {}]
  %s1 = inlined_call_operand.vmem [shape: f32[4,4], index: 1, kind: input, shape index: {}]
  %s2 = inlined_call_operand.vmem [shape: f32[4,1], index: 2, kind: input, shape index: {}]
  %s3 = inlined_call_operand.hbm [shape: f32[2,4,256], index: 3, kind: output, shape index: {}]
  %s4 = sld [smem:[#allocation0]]
  $region49: #{tpu_custom_call.1} parent=0
    _
  %s6 = ssub.s32 1, %s4
  %s7 = scalar_select 0, %s6, %s4
  $region1: #{tpu_custom_call.1} parent=0
    #allocation2 [shape = 'u8[8192]{0}', space=vmem, size = 0x2000, scoped, tag = 'input window, operand 0']
    #allocation3 [shape = 's32[2]{0}', space=sflag, size = 0x8, scoped, tag = 'scoped memory for tpu_custom_call.1']
    #allocation4 [shape = 's32[2]{0}', space=sflag, size = 0x8, scoped, tag = 'scoped memory for tpu_custom_call.1']
    #allocation5 [shape = 'u8[8192]{0}', space=vmem, size = 0x2000, scoped, tag = 'output window, operand 0']
    %8 = vsyncpa [#allocation3], 0
    %s9 = scalar_lea.sflag [#allocation3], 1
    %10 = vsyncpa %s9, 0
    %11 = vsyncpa [#allocation4], 0
    %s12 = scalar_lea.sflag [#allocation4], 1
    %13 = vsyncpa %s12, 0
    loop: start=0, step=1, limit=4
    $region2: #{tpu_custom_call.1} parent=1 // loop_pre_header
      _
    $region3: #{tpu_custom_call.1} parent=1 // loop_header
      %s15 = sphi 0, %s19
      %p16 = scmp.ge.s32.totalorder %s15, 4
      %s25 = sphi 0, %s27
      %s28 = sphi 0, %s25
      %s29 = sphi 0, %s28
      %s45 = sphi 0, %s29
      %s49 = sphi 0, %s49
      %s51 = sphi 0, %s49
      %s52 = sphi 0, %s51
      %s66 = sphi 0, %s52
      %s70 = sphi 0, %s70
      %s72 = sphi 0, %s70
      %s73 = sphi 0, %s72
      %s87 = sphi 0, %s73
      %s93 = sphi 0, %s95
      %s96 = sphi 0, %s93
      %s97 = sphi 0, %s96
      %s113 = sphi 0, %s97
    $region4: #{tpu_custom_call.1} parent=1 // loop_header_branch
      %18 = sbr.rel (%p16) target = $region8
    $region5: #{tpu_custom_call.1} parent=1 // loop_body
      %s20 = ssub.s32 %s15, 1
      %s21 = ssub.s32 %s15, 2
      %s22 = sadd.s32 %s15, 1
      %s23 = ssub.s32 %s15, %s22
      %p24 = scmp.eq.s32.totalorder %s23, 0
      %s26 = sadd.s32 %s25, 1
      %s27 = scalar_select %p24, %s25, %s26
      %p30 = pneg %p24
      %p31 = scmp.eq.s32.totalorder %s15, 1
      %p32 = por %p30, %p31
      %p33 = scmp.ne.s32.totalorder %s25, %s28
      %p34 = scmp.eq.s32.totalorder %s15, 0
      %p35 = por %p33, %p34
      %p36 = scmp.ne.s32.totalorder %s25, %s28
      %p37 = scmp.eq.s32.totalorder %s20, 1
      %p38 = por %p36, %p37
      %p39 = scmp.ne.s32.totalorder %s28, %s29
      %p40 = scmp.eq.s32.totalorder %s20, 0
      %p41 = por %p39, %p40
      %p42 = scmp.ne.s32.totalorder %s28, %s29
      %p43 = scmp.eq.s32.totalorder %s21, 1
      %p44 = por %p42, %p43
      %p46 = scmp.ne.s32.totalorder %s29, %s45
      %p47 = scmp.eq.s32.totalorder %s21, 0
      %p48 = por %p46, %p47
      %s50 = sadd.s32 %s49, 1
      %p53 = scmp.eq.s32.totalorder %s15, 1
      %p54 = scmp.ne.s32.totalorder %s49, %s51
      %p55 = scmp.eq.s32.totalorder %s15, 0
      %p56 = por %p54, %p55
      %p57 = scmp.ne.s32.totalorder %s49, %s51
      %p58 = scmp.eq.s32.totalorder %s20, 1
      %p59 = por %p57, %p58
      %p60 = scmp.ne.s32.totalorder %s51, %s52
      %p61 = scmp.eq.s32.totalorder %s20, 0
      %p62 = por %p60, %p61
      %p63 = scmp.ne.s32.totalorder %s51, %s52
      %p64 = scmp.eq.s32.totalorder %s21, 1
      %p65 = por %p63, %p64
      %p67 = scmp.ne.s32.totalorder %s52, %s66
      %p68 = scmp.eq.s32.totalorder %s21, 0
      %p69 = por %p67, %p68
      %s71 = sadd.s32 %s70, 1
      %p74 = scmp.eq.s32.totalorder %s15, 1
      %p75 = scmp.ne.s32.totalorder %s70, %s72
      %p76 = scmp.eq.s32.totalorder %s15, 0
      %p77 = por %p75, %p76
      %p78 = scmp.ne.s32.totalorder %s70, %s72
      %p79 = scmp.eq.s32.totalorder %s20, 1
      %p80 = por %p78, %p79
      %p81 = scmp.ne.s32.totalorder %s72, %s73
      %p82 = scmp.eq.s32.totalorder %s20, 0
      %p83 = por %p81, %p82
      %p84 = scmp.ne.s32.totalorder %s72, %s73
      %p85 = scmp.eq.s32.totalorder %s21, 1
      %p86 = por %p84, %p85
      %p88 = scmp.ne.s32.totalorder %s73, %s87
      %p89 = scmp.eq.s32.totalorder %s21, 0
      %p90 = por %p88, %p89
      %s91 = ssub.s32 %s15, %s22
      %p92 = scmp.eq.s32.totalorder %s91, 0
      %s94 = sadd.s32 %s93, 1
      %s95 = scalar_select %p92, %s93, %s94
      %p98 = pneg %p92
      %p99 = scmp.eq.s32.totalorder %s15, 1
      %p100 = por %p98, %p99
      %p101 = scmp.ne.s32.totalorder %s93, %s96
      %p102 = scmp.eq.s32.totalorder %s15, 0
      %p103 = por %p101, %p102
      %p104 = scmp.ne.s32.totalorder %s93, %s96
      %p105 = scmp.eq.s32.totalorder %s20, 1
      %p106 = por %p104, %p105
      %p107 = scmp.ne.s32.totalorder %s96, %s97
      %p108 = scmp.eq.s32.totalorder %s20, 0
      %p109 = por %p107, %p108
      %p110 = scmp.ne.s32.totalorder %s96, %s97
      %p111 = scmp.eq.s32.totalorder %s21, 1
      %p112 = por %p110, %p111
      %p114 = scmp.ne.s32.totalorder %s97, %s113
      %p115 = scmp.eq.s32.totalorder %s21, 0
      %p116 = por %p114, %p115
      %p117 = scmp.le.s32.totalorder 1, %s15
      %p118 = scmp.lt.s32.totalorder %s15, 3
      %p119 = pnand %p117, %p118
      %p120 = pneg %p119
      // Predicated region
      $region9: #{tpu_custom_call.1} parent=5 // pred_check
        _
      $region10: #{tpu_custom_call.1} parent=5 // pred_check_branch
        %122 = sbr.rel (%p119) target = $region12
      $region11: #{tpu_custom_call.1} parent=5 // pred_region
        %s123 = ssub.s32 %s15, 1
        // Predicated region
        $region13: #{tpu_custom_call.1} parent=11 // pred_check
          %p124 = pneg %p62
        $region14: #{tpu_custom_call.1} parent=11 // pred_check_branch
          %126 = sbr.rel (%p124) target = $region16
        $region15: #{tpu_custom_call.1} parent=11 // pred_region
          _
        $region16: #{tpu_custom_call.1} parent=11 // pred_fallthru
          _
        // Predicated region
        $region17: #{tpu_custom_call.1} parent=11 // pred_check
          %p127 = pneg %p83
        $region18: #{tpu_custom_call.1} parent=11 // pred_check_branch
          %129 = sbr.rel (%p127) target = $region20
        $region19: #{tpu_custom_call.1} parent=11 // pred_region
          _
        $region20: #{tpu_custom_call.1} parent=11 // pred_fallthru
          _
      $region12: #{tpu_custom_call.1} parent=5 // pred_fallthru
        _
      %p130 = scmp.lt.s32.totalorder %s15, 2
      // Predicated region
      $region21: #{tpu_custom_call.1} parent=5 // pred_check
        %p131 = pneg %p130
      $region22: #{tpu_custom_call.1} parent=5 // pred_check_branch
        %133 = sbr.rel (%p131) target = $region24
      $region23: #{tpu_custom_call.1} parent=5 // pred_region
        // Predicated region
        $region25: #{tpu_custom_call.1} parent=23 // pred_check
          %p134 = pneg %p35
        $region26: #{tpu_custom_call.1} parent=23 // pred_check_branch
          %136 = sbr.rel (%p134) target = $region28
        $region27: #{tpu_custom_call.1} parent=23 // pred_region
          %s137 = sand.u32 %s25, 1
          %s138 = scalar_lea.sflag [#allocation3], %s137
          %s139 = sand.u32 %s25, 1
          %s140 = smul.addr %s139, 8
          %s141 = scalar_lea.vmem [#allocation2], %s140
          %143 = vsyncadd %s138, 0
          %s144 = smul.addr %s15, 2
          %s145 = smul.addr %s144, 4
          %s146 = scalar_lea.hbm %s0, %s145
          %s148 = sshll.u32 %s146, 4
          %s149 = int_to_ptr.hbm [resolvable:$true] %s148
          %s150 = sshll.u32 %s141, 4
          %s151 = int_to_ptr.vmem [resolvable:$true] %s150
          %153 = dma.hbm_to_vmem [thread:$0]  %s149, 128, %s151, %s138
        $region28: #{tpu_custom_call.1} parent=23 // pred_fallthru
          _
      $region24: #{tpu_custom_call.1} parent=5 // pred_fallthru
        _
      %p154 = scmp.le.s32.totalorder 1, %s15
      %p155 = scmp.lt.s32.totalorder %s15, 3
      %p156 = pnand %p154, %p155
      %p157 = pneg %p156
      // Predicated region
      $region29: #{tpu_custom_call.1} parent=5 // pred_check
        _
      $region30: #{tpu_custom_call.1} parent=5 // pred_check_branch
        %159 = sbr.rel (%p156) target = $region32
      $region31: #{tpu_custom_call.1} parent=5 // pred_region
        %s160 = ssub.s32 %s15, 1
        %s161 = sand.u32 %s28, 1
        %s162 = scalar_lea.sflag [#allocation3], %s161
        %s163 = sand.u32 %s28, 1
        %s164 = smul.addr %s163, 8
        %s165 = scalar_lea.vmem [#allocation2], %s164
        // Predicated region
        $region33: #{tpu_custom_call.1} parent=31 // pred_check
          %p166 = pneg %p41
        $region34: #{tpu_custom_call.1} parent=31 // pred_check_branch
          %168 = sbr.rel (%p166) target = $region36
        $region35: #{tpu_custom_call.1} parent=31 // pred_region
          %170 = dma.done %s162, 128
        $region36: #{tpu_custom_call.1} parent=31 // pred_fallthru
          _
        %s171 = sand.u32 %s28, 1
        %s172 = scalar_lea.sflag [#allocation3], %s171
        %s173 = sand.u32 %s28, 1
        %s174 = smul.addr %s173, 8
        %s175 = scalar_lea.vmem [#allocation2], %s174
        %p176 = pneg %p41
        %p177 = pneg %p38
        %p178 = pneg %p62
        %p179 = pneg %p59
        %p180 = pneg %p83
        %p181 = pneg %p80
        %p182 = pneg %p109
        %p183 = pneg %p106
        %s184 = sand.u32 %s96, 1
        %s185 = scalar_lea.sflag [#allocation4], %s184
        %s186 = sand.u32 %s96, 1
        %s187 = smul.addr %s186, 8
        %s188 = scalar_lea.vmem [#allocation5], %s187
        %v189 = vld [vmem:[%s165] sm:$0xff]
        %191 = vst [vmem:[#allocation1] ss:$2 sm:$0xff] %v189
        %v192 = vld.sshfl [vmem:[#allocation1] sm:$0xff pattern:$0x75316420]
        %v193 = vld.sshfl [vmem:[#allocation1 + $0x8] sm:$0xff pattern:$0x75316420]
        %vm196 = vcmask 1043456
        %v197 = vsel %vm196, %v192, 0.0
        %v198 = vsel %vm196, %v193, 0.0
        %v199 = vadd.f32 %v197, %v198
        %200 = vadd.xlane.f32.xlu0 %v199
        %v201 = vpop.xlane.xlu0 %200
        %v202 = vmul.f32 %v201, 0.00390625
        %v203 = vld [vmem:[%s1] sm:$0xf]
        %v204 = vld [vmem:[%s2] sm:$0xf]
        %vm205 = vcmask 31744
        %v207 = vsel %vm205, %v203, 0
        %v210 = vsel %vm196, %v202, 0
        %212 = vmatpush.msra.mxu0 0.0
        %213 = vmatpush.msra.mxu0 0.0
        %214 = vmatpush.msra.mxu0 0.0
        %215 = vmatpush.msra.mxu0 0.0
        %216 = vmatpush.msra.mxu0 0.0
        %217 = vmatpush.msra.mxu0 0.0
        %218 = vmatpush.msra.mxu0 0.0
        %219 = vmatpush.msra.mxu0 0.0
        %220 = vmatpush.msra.mxu0 0.0
        %221 = vmatpush.msra.mxu0 0.0
        %222 = vmatpush.msra.mxu0 0.0
        %223 = vmatpush.msra.mxu0 0.0
        %224 = vmatpush.msra.mxu0 0.0
        %225 = vmatpush.msra.mxu0 0.0
        %226 = vmatpush.msra.mxu0 0.0
        %227 = vmatpush.msra.mxu0 %v210
        %228 = vmatmul.f32.gmra.mxu0 %v207
        %v229 = vpop.f32.mrf.mxu0
        %v230 = vadd.f32 %v204, %v229
        %231 = vdwg.mxu0
        %233 = vset.pattern.permute.xlu0 0
        %234 = vperm.xlu0 %233, %v230
        %v235 = vpop.permute.xlu0 %234
        %v237 = vunpack.c.l.s4 839922192
        %v238 = vunpack.c.0.s8 %v237
        %v239 = vperm.slane %v235, %v238
        %v241 = vmul.f32 %v189, %v239
        %242 = vst [vmem:[%s188] sm:$0xff] %v241
        %s243 = sand.u32 %s96, 1
        %s244 = scalar_lea.sflag [#allocation4], %s243
        %s245 = sand.u32 %s96, 1
        %s246 = smul.addr %s245, 8
        %s247 = scalar_lea.vmem [#allocation5], %s246
        // Predicated region
        $region37: #{tpu_custom_call.1} parent=31 // pred_check
          %p248 = pneg %p106
        $region38: #{tpu_custom_call.1} parent=31 // pred_check_branch
          %250 = sbr.rel (%p248) target = $region40
        $region39: #{tpu_custom_call.1} parent=31 // pred_region
          %252 = vsyncadd %s244, 0
          %s253 = smul.addr %s20, 2
          %s254 = smul.addr %s253, 4
          %s255 = scalar_lea.hbm %s3, %s254
          %s257 = sshll.u32 %s247, 4
          %s258 = int_to_ptr.vmem [resolvable:$true] %s257
          %s259 = sshll.u32 %s255, 4
          %s260 = int_to_ptr.hbm [resolvable:$true] %s259
          %262 = dma.vmem_to_hbm [thread:$0]  %s258, 128, %s260, %s244
        $region40: #{tpu_custom_call.1} parent=31 // pred_fallthru
          _
      $region32: #{tpu_custom_call.1} parent=5 // pred_fallthru
        _
      %p263 = scmp.le.s32.totalorder 2, %s15
      // Predicated region
      $region41: #{tpu_custom_call.1} parent=5 // pred_check
        %p264 = pneg %p263
      $region42: #{tpu_custom_call.1} parent=5 // pred_check_branch
        %266 = sbr.rel (%p264) target = $region44
      $region43: #{tpu_custom_call.1} parent=5 // pred_region
        %s267 = ssub.s32 %s15, 2
        // Predicated region
        $region45: #{tpu_custom_call.1} parent=43 // pred_check
          %p268 = pneg %p112
        $region46: #{tpu_custom_call.1} parent=43 // pred_check_branch
          %270 = sbr.rel (%p268) target = $region48
        $region47: #{tpu_custom_call.1} parent=43 // pred_region
          %s271 = sand.u32 %s97, 1
          %s272 = scalar_lea.sflag [#allocation4], %s271
          %s273 = sand.u32 %s97, 1
          %s274 = smul.addr %s273, 8
          %s275 = scalar_lea.vmem [#allocation5], %s274
          %277 = dma.done %s272, 128
        $region48: #{tpu_custom_call.1} parent=43 // pred_fallthru
          _
      $region44: #{tpu_custom_call.1} parent=5 // pred_fallthru
        _
    $region6: #{tpu_custom_call.1} parent=1 // loop_footer
      %s19 = sadd.s32 1, %s15
    $region7: #{tpu_custom_call.1} parent=1 // loop_footer_branch
      %14 = sbr.rel target = $region3
    $region8: #{tpu_custom_call.1} parent=1 // loop_exit
      _
    %278 = vsyncpa [#allocation3], 1
    %s279 = scalar_lea.sflag [#allocation3], 1
    %280 = vsyncpa %s279, 1
    %281 = vsyncpa [#allocation4], 1
    %s282 = scalar_lea.sflag [#allocation4], 1
    %283 = vsyncpa %s282, 1

</llo_original>
